<compile_context>
chip_gen: v7x
topology: tpu7x:2x2x1
jax: 0.10.0
libtpu: 0.0.40
codegen_flags: <defaults>
</compile_context>

<pallas_src>
import numpy as np
import jax
import jax.numpy as jnp
from jax.experimental import pallas as pl
from jax.experimental.pallas import tpu as pltpu


def _grid_pool_kernel(x_ref, cn_ref, rn_ref, rt_ref, ct_ref, scale_ref,
                      out_ref, mat_ref):
    tb, h, w = x_ref.shape
    n_seg = cn_ref.shape[1]

    # 1) Column sum-pool on the MXU: (tb*h, w) @ (w, N), f32 accumulation.
    #    x feeds the MXU in its native dtype (Cn is one-hot, exact in bf16).
    x2 = x_ref[...].reshape(tb * h, w)
    ca = jnp.dot(x2, cn_ref[...], preferred_element_type=jnp.float32)   # (tb*h, N)
    ca3 = ca.reshape(tb, h, n_seg)                                       # (tb, h, N)

    # 2) Row sum-pool, batched over the tb slices (all-f32 from here on; the
    #    per-slice matrices are tiny so MXU rate is irrelevant).
    mat_sum = jnp.einsum('tmi,tin->tmn', rn_ref[...], ca3,
                         preferred_element_type=jnp.float32)             # (tb, M, N)

    # 3) Exact normalization on the (otherwise idle) VPU:
    #    scale[m, n] = 1 / (rows[m] * cols[n]), precomputed in f32.
    mat = mat_sum * scale_ref[...]                                       # (tb, M, N) f32
    mat_ref[...] = mat.astype(mat_ref.dtype)

    # 4) Broadcast back: rows first (cheap, works on the N-wide intermediate),
    #    then columns, landing straight in the natural (tb, h, w) layout.
    rtmp = jnp.einsum('tim,tmn->tin', rt_ref[...], mat,
                      preferred_element_type=jnp.float32)                # (tb, h, N)
    out = jnp.dot(rtmp.reshape(tb * h, n_seg), ct_ref[...],
                  preferred_element_type=jnp.float32)                    # (tb*h, w)
    out_ref[...] = out.reshape(tb, h, w).astype(out_ref.dtype)


def _build_projection_mats(h, w, h_line, v_line):
    # bounds = round(size * [0, *lines, 1]) — same as the torch module.
    hb = np.round(h * np.array([0.0] + list(h_line) + [1.0], dtype=np.float64)).astype(np.int64)
    vb = np.round(w * np.array([0.0] + list(v_line) + [1.0], dtype=np.float64)).astype(np.int64)
    if np.any(np.diff(hb) <= 0) or np.any(np.diff(vb) <= 0):
        raise ValueError("grid architecture produces a zero-width segment")
    M, N = len(hb) - 1, len(vb) - 1
    rows = np.diff(hb).astype(np.float64)
    cols = np.diff(vb).astype(np.float64)

    rn = np.zeros((M, h), np.float32)   # row SUM projector (one-hot)
    rt = np.zeros((h, M), np.float32)   # row broadcast-back (one-hot)
    for m in range(M):
        rn[m, hb[m]:hb[m + 1]] = 1.0
        rt[hb[m]:hb[m + 1], m] = 1.0
    cn = np.zeros((w, N), np.float32)   # column SUM projector (one-hot)
    ct = np.zeros((N, w), np.float32)   # column broadcast-back (one-hot)
    for n in range(N):
        cn[vb[n]:vb[n + 1], n] = 1.0
        ct[n, vb[n]:vb[n + 1]] = 1.0

    scale = (1.0 / (rows[:, None] * cols[None, :])).astype(np.float32)   # (M, N)
    return rn, cn, rt, ct, scale, M, N


def _vmem_budget():
    """Generation-aware scoped-VMEM limit + tiling budget."""
    phys = 64 << 20                       # conservative fallback = v7x per-core VMEM
    try:
        info = pltpu.get_tpu_info()
        cap = getattr(info, "vmem_capacity_bytes", None)
        if cap:
            phys = int(cap)
    except Exception:
        pass
    vmem_limit = min(96 << 20, (phys * 3) // 4)   # 96 MiB on v5e/v6e, 48 MiB on v7x
    budget = max(vmem_limit - (8 << 20), 8 << 20)  # headroom for compiler scratch
    return vmem_limit, budget


def _choose_tb(bc, h, w, m, n, itemsize, vmem_budget):
    """Largest tile (in b*c slices) whose double-buffered working set fits the
    VMEM budget, capped so there are >= 2 grid steps (v7x megacore / pipeline)."""
    xtile_cap = 6 << 20   # keep a single x/out tile <= ~6 MiB (HBM-roofline sized, v7x-safe)

    def cost(tb):
        xt = tb * h * w * itemsize            # input tile
        ot = tb * h * w * itemsize            # output tile
        mt = tb * m * n * itemsize            # matrix tile
        const = (w * n * itemsize             # Cn in x dtype
                 + (tb * m * h + tb * h * m + n * w + m * n) * 4)   # f32 constants
        return 2 * (xt + ot + mt + const)     # conservative: everything double-buffered

    tb = 1
    for cand in range(1, bc + 1):
        if cost(cand) <= vmem_budget and cand * h * w * itemsize <= xtile_cap:
            tb = cand
        else:
            break
    if bc >= 2:                                # keep both v7x TensorCores busy
        tb = min(tb, -(-bc // 2))
    return max(tb, 1)


def grid_project_pooling(x, architecture):
    """x: (b, c, h, w); architecture: (h_line, v_line) lists of fractions in (0, 1)."""
    h_line, v_line = architecture
    b, c, h, w = x.shape
    bc = b * c
    dtype = x.dtype
    itemsize = np.dtype(dtype).itemsize

    rn, cn, rt, ct, scale, M, N = _build_projection_mats(h, w, h_line, v_line)

    vmem_limit, budget = _vmem_budget()
    tb = _choose_tb(bc, h, w, M, N, itemsize, budget)
    nt = -(-bc // tb)   # cdiv; tb need not divide bc (ragged last block is masked)

    # Constants: one-hot Cn in x dtype feeds the MXU natively; the rest are
    # tiny and stay f32 for exact sums.  Rn/Rt are pre-broadcast over tb so the
    # in-kernel contractions are plain batched matmuls (no in-kernel transposes).
    cn_j = jnp.asarray(cn, dtype=dtype)
    ct_j = jnp.asarray(ct, dtype=jnp.float32)
    rn3_j = jnp.asarray(np.broadcast_to(rn[None], (tb, M, h)), dtype=jnp.float32)
    rt3_j = jnp.asarray(np.broadcast_to(rt[None], (tb, h, M)), dtype=jnp.float32)
    scale_j = jnp.asarray(scale[None], dtype=jnp.float32)          # (1, M, N)

    # Natural layout — a free reshape, no HBM transpose around the kernel.
    x2 = x.reshape(bc, h, w)

    flops = 4 * nt * tb * h * N * (w + M)
    bytes_accessed = (2 * bc * h * w * itemsize                     # x in + out
                      + bc * M * N * itemsize                       # matrix out
                      + cn.size * itemsize
                      + (rn3_j.size + rt3_j.size + ct.size + scale.size) * 4)

    out2, mat2 = pl.pallas_call(
        _grid_pool_kernel,
        out_shape=(
            jax.ShapeDtypeStruct((bc, h, w), dtype),
            jax.ShapeDtypeStruct((bc, M, N), dtype),
        ),
        grid_spec=pltpu.PrefetchScalarGridSpec(
            num_scalar_prefetch=0,
            grid=(nt,),
            in_specs=[
                pl.BlockSpec((tb, h, w), lambda i: (i, 0, 0)),    # x tile (natural layout)
                pl.BlockSpec((w, N), lambda i: (0, 0)),           # Cn    (resident)
                pl.BlockSpec((tb, M, h), lambda i: (0, 0, 0)),    # Rn3   (resident)
                pl.BlockSpec((tb, h, M), lambda i: (0, 0, 0)),    # Rt3   (resident)
                pl.BlockSpec((N, w), lambda i: (0, 0)),           # Ct    (resident)
                pl.BlockSpec((1, M, N), lambda i: (0, 0, 0)),     # scale (resident, f32)
            ],
            out_specs=(
                pl.BlockSpec((tb, h, w), lambda i: (i, 0, 0)),    # output (natural layout)
                pl.BlockSpec((tb, M, N), lambda i: (i, 0, 0)),    # pooled matrix
            ),
        ),
        compiler_params=pltpu.CompilerParams(
            dimension_semantics=("parallel",),
            vmem_limit_bytes=int(vmem_limit),
        ),
        cost_estimate=pl.CostEstimate(flops=int(flops), transcendentals=0,
                                      bytes_accessed=int(bytes_accessed)),
    )(x2, cn_j, rn3_j, rt3_j, ct_j, scale_j)

    # Pure (free) reshapes back to the module's output shapes.
    return out2.reshape(b, c, h, w), mat2.reshape(b, c, M, N)


def _reference(x, h_line, v_line):
    x = np.asarray(x, np.float64)
    b, c, h, w = x.shape
    hb = np.round(h * np.array([0.0] + list(h_line) + [1.0])).astype(int)
    vb = np.round(w * np.array([0.0] + list(v_line) + [1.0])).astype(int)
    M, N = len(hb) - 1, len(vb) - 1
    out = np.zeros_like(x)
    mat = np.zeros((b, c, M, N))
    for m in range(M):
        for n in range(N):
            blk = x[:, :, hb[m]:hb[m + 1], vb[n]:vb[n + 1]]
            mean = blk.mean(axis=(2, 3))
            mat[:, :, m, n] = mean
            out[:, :, hb[m]:hb[m + 1], vb[n]:vb[n + 1]] = mean[:, :, None, None]
    return out, mat


if __name__ == "__main__":
    key = jax.random.PRNGKey(0)
    b, c, h, w = 2, 4, 16, 16
    x = jax.random.normal(key, (b, c, h, w), dtype=jnp.float32)

    # Grid architecture (non-uniform): rows -> [4, 6, 6], cols -> [8, 8].
    h_line = [0.25, 0.625]
    v_line = [0.5]

    out, mat = grid_project_pooling(x, (h_line, v_line))
    out = jax.block_until_ready(out)
    mat = jax.block_until_ready(mat)

    ref_out, ref_mat = _reference(np.asarray(x), h_line, v_line)
    np.testing.assert_allclose(np.asarray(out), ref_out, rtol=1e-5, atol=1e-5)
    np.testing.assert_allclose(np.asarray(mat), ref_mat, rtol=1e-5, atol=1e-5)

    print("KERNEL_OK")
</pallas_src>

<mosaic_0001>
module attributes {stable_mosaic.version = 11 : i64} {
  func.func @_grid_pool_kernel(%arg0: i32, %arg1: memref<4x16x16xf32, #tpu.memory_space<vmem>>, %arg2: memref<16x2xf32, #tpu.memory_space<vmem>>, %arg3: memref<4x3x16xf32, #tpu.memory_space<vmem>>, %arg4: memref<4x16x3xf32, #tpu.memory_space<vmem>>, %arg5: memref<2x16xf32, #tpu.memory_space<vmem>>, %arg6: memref<1x3x2xf32, #tpu.memory_space<vmem>>, %arg7: memref<4x16x16xf32, #tpu.memory_space<vmem>>, %arg8: memref<4x3x2xf32, #tpu.memory_space<vmem>>) attributes {dimension_semantics = [#tpu.dimension_semantics<parallel>], iteration_bounds = array<i64: 2>, scalar_prefetch = 0 : i64, scratch_operands = 0 : i64, tpu.core_type = #tpu.core_type<tc>, window_params = [{transform_indices = @transform_0, window_bounds = array<i64: 4, 16, 16>}, {pipeline_mode = #tpu.pipeline_mode<synchronous>, transform_indices = @transform_1, window_bounds = array<i64: 16, 2>}, {pipeline_mode = #tpu.pipeline_mode<synchronous>, transform_indices = @transform_2, window_bounds = array<i64: 4, 3, 16>}, {pipeline_mode = #tpu.pipeline_mode<synchronous>, transform_indices = @transform_3, window_bounds = array<i64: 4, 16, 3>}, {pipeline_mode = #tpu.pipeline_mode<synchronous>, transform_indices = @transform_4, window_bounds = array<i64: 2, 16>}, {pipeline_mode = #tpu.pipeline_mode<synchronous>, transform_indices = @transform_5, window_bounds = array<i64: 1, 3, 2>}, {transform_indices = @transform_6, window_bounds = array<i64: 4, 16, 16>}, {transform_indices = @transform_7, window_bounds = array<i64: 4, 3, 2>}]} {
    %c0 = arith.constant 0 : index
    %c0_0 = arith.constant 0 : index
    %c0_1 = arith.constant 0 : index
    %0 = vector.load %arg1[%c0, %c0_0, %c0_1] : memref<4x16x16xf32, #tpu.memory_space<vmem>>, vector<4x16x16xf32>
    %1 = vector.shape_cast %0 : vector<4x16x16xf32> to vector<64x16xf32>
    %c0_2 = arith.constant 0 : index
    %c0_3 = arith.constant 0 : index
    %2 = vector.load %arg2[%c0_2, %c0_3] : memref<16x2xf32, #tpu.memory_space<vmem>>, vector<16x2xf32>
    %cst = arith.constant dense<0.000000e+00> : vector<64x2xf32>
    %3 = tpu.matmul %1, %2, %cst {dimension_numbers = #tpu.dot_dimension_numbers<[1], [0], [0], [1], [0, 0, 1, 1], [], []>} : vector<64x16xf32>, vector<16x2xf32>, vector<64x2xf32> -> vector<64x2xf32>
    %4 = vector.shape_cast %3 : vector<64x2xf32> to vector<4x16x2xf32>
    %c0_4 = arith.constant 0 : index
    %c0_5 = arith.constant 0 : index
    %c0_6 = arith.constant 0 : index
    %5 = vector.load %arg3[%c0_4, %c0_5, %c0_6] : memref<4x3x16xf32, #tpu.memory_space<vmem>>, vector<4x3x16xf32>
    "tpu.trace_start"() <{level = 10 : i32, message = "tmi,tin->tmn"}> : () -> ()
    %cst_7 = arith.constant dense<0.000000e+00> : vector<4x3x2xf32>
    %6 = tpu.matmul %5, %4, %cst_7 {dimension_numbers = #tpu.dot_dimension_numbers<[2], [1], [1], [2], [0, 0, 0, 1, 1, 2], [0], [0]>} : vector<4x3x16xf32>, vector<4x16x2xf32>, vector<4x3x2xf32> -> vector<4x3x2xf32>
    "tpu.trace_stop"() : () -> ()
    %c0_8 = arith.constant 0 : index
    %c0_9 = arith.constant 0 : index
    %c0_10 = arith.constant 0 : index
    %7 = vector.load %arg6[%c0_8, %c0_9, %c0_10] : memref<1x3x2xf32, #tpu.memory_space<vmem>>, vector<1x3x2xf32>
    %8 = vector.broadcast %7 : vector<1x3x2xf32> to vector<4x3x2xf32>
    %9 = arith.mulf %6, %8 : vector<4x3x2xf32>
    %c0_11 = arith.constant 0 : index
    %c0_12 = arith.constant 0 : index
    %c0_13 = arith.constant 0 : index
    %10 = vector.load %arg8[%c0_11, %c0_12, %c0_13] : memref<4x3x2xf32, #tpu.memory_space<vmem>>, vector<4x3x2xf32>
    tpu.vector_store %arg8[%c0_11, %c0_12, %c0_13], %9 {strides = array<i32>} : memref<4x3x2xf32, #tpu.memory_space<vmem>>, vector<4x3x2xf32>,
    %c0_14 = arith.constant 0 : index
    %c0_15 = arith.constant 0 : index
    %c0_16 = arith.constant 0 : index
    %11 = vector.load %arg4[%c0_14, %c0_15, %c0_16] : memref<4x16x3xf32, #tpu.memory_space<vmem>>, vector<4x16x3xf32>
    "tpu.trace_start"() <{level = 10 : i32, message = "tim,tmn->tin"}> : () -> ()
    %cst_17 = arith.constant dense<0.000000e+00> : vector<4x16x2xf32>
    %12 = tpu.matmul %11, %9, %cst_17 {dimension_numbers = #tpu.dot_dimension_numbers<[2], [1], [1], [2], [0, 0, 0, 1, 1, 2], [0], [0]>} : vector<4x16x3xf32>, vector<4x3x2xf32>, vector<4x16x2xf32> -> vector<4x16x2xf32>
    "tpu.trace_stop"() : () -> ()
    %13 = vector.shape_cast %12 : vector<4x16x2xf32> to vector<64x2xf32>
    %c0_18 = arith.constant 0 : index
    %c0_19 = arith.constant 0 : index
    %14 = vector.load %arg5[%c0_18, %c0_19] : memref<2x16xf32, #tpu.memory_space<vmem>>, vector<2x16xf32>
    %cst_20 = arith.constant dense<0.000000e+00> : vector<64x16xf32>
    %15 = tpu.matmul %13, %14, %cst_20 {dimension_numbers = #tpu.dot_dimension_numbers<[1], [0], [0], [1], [0, 0, 1, 1], [], []>} : vector<64x2xf32>, vector<2x16xf32>, vector<64x16xf32> -> vector<64x16xf32>
    %16 = vector.shape_cast %15 : vector<64x16xf32> to vector<4x16x16xf32>
    %c0_21 = arith.constant 0 : index
    %c0_22 = arith.constant 0 : index
    %c0_23 = arith.constant 0 : index
    %17 = vector.load %arg7[%c0_21, %c0_22, %c0_23] : memref<4x16x16xf32, #tpu.memory_space<vmem>>, vector<4x16x16xf32>
    tpu.vector_store %arg7[%c0_21, %c0_22, %c0_23], %16 {strides = array<i32>} : memref<4x16x16xf32, #tpu.memory_space<vmem>>, vector<4x16x16xf32>,
    return
  }
  func.func @transform_0(%arg0: i32) -> (i32, i32, i32) {
    %c0_i32 = arith.constant 0 : i32
    %c0_i32_0 = arith.constant 0 : i32
    %c0_i32_1 = arith.constant 0 : i32
    return %arg0, %c0_i32, %c0_i32_0 : i32, i32, i32
  }
  func.func @transform_1(%arg0: i32) -> (i32, i32) {
    %c0_i32 = arith.constant 0 : i32
    %c0_i32_0 = arith.constant 0 : i32
    %c0_i32_1 = arith.constant 0 : i32
    return %c0_i32, %c0_i32_0 : i32, i32
  }
  func.func @transform_2(%arg0: i32) -> (i32, i32, i32) {
    %c0_i32 = arith.constant 0 : i32
    %c0_i32_0 = arith.constant 0 : i32
    %c0_i32_1 = arith.constant 0 : i32
    %c0_i32_2 = arith.constant 0 : i32
    return %c0_i32, %c0_i32_0, %c0_i32_1 : i32, i32, i32
  }
  func.func @transform_3(%arg0: i32) -> (i32, i32, i32) {
    %c0_i32 = arith.constant 0 : i32
    %c0_i32_0 = arith.constant 0 : i32
    %c0_i32_1 = arith.constant 0 : i32
    %c0_i32_2 = arith.constant 0 : i32
    return %c0_i32, %c0_i32_0, %c0_i32_1 : i32, i32, i32
  }
  func.func @transform_4(%arg0: i32) -> (i32, i32) {
    %c0_i32 = arith.constant 0 : i32
    %c0_i32_0 = arith.constant 0 : i32
    %c0_i32_1 = arith.constant 0 : i32
    return %c0_i32, %c0_i32_0 : i32, i32
  }
  func.func @transform_5(%arg0: i32) -> (i32, i32, i32) {
    %c0_i32 = arith.constant 0 : i32
    %c0_i32_0 = arith.constant 0 : i32
    %c0_i32_1 = arith.constant 0 : i32
    %c0_i32_2 = arith.constant 0 : i32
    return %c0_i32, %c0_i32_0, %c0_i32_1 : i32, i32, i32
  }
  func.func @transform_6(%arg0: i32) -> (i32, i32, i32) {
    %c0_i32 = arith.constant 0 : i32
    %c0_i32_0 = arith.constant 0 : i32
    %c0_i32_1 = arith.constant 0 : i32
    return %arg0, %c0_i32, %c0_i32_0 : i32, i32, i32
  }
  func.func @transform_7(%arg0: i32) -> (i32, i32, i32) {
    %c0_i32 = arith.constant 0 : i32
    %c0_i32_0 = arith.constant 0 : i32
    %c0_i32_1 = arith.constant 0 : i32
    return %arg0, %c0_i32, %c0_i32_0 : i32, i32, i32
  }
}

</mosaic_0001>

<llo_original>
// kernel: tpu_custom_call.1
$region0: #{tpu_custom_call.1}
  #allocation0 [shape = 'u32[]', space=smem, size = 0x4, offset = 0x4, fixed_abs, tag = 'smem constant byte address 0x4 - core index']
  #allocation1 [shape = 'u32[144,128]{1,0:T(1,128)}', space=vmem, size = 0x12000, scoped, tag = 'internal scratch']
  %s0 = inlined_call_operand.vmem [shape: f32[8,16,16], index: 0, kind: input, shape index: {}]
  %s1 = inlined_call_operand.vmem [shape: f32[16,2], index: 1, kind: input, shape index: {}]
  %s2 = inlined_call_operand.vmem [shape: f32[4,3,16], index: 2, kind: input, shape index: {}]
  %s3 = inlined_call_operand.vmem [shape: f32[4,16,3], index: 3, kind: input, shape index: {}]
  %s4 = inlined_call_operand.vmem [shape: f32[2,16], index: 4, kind: input, shape index: {}]
  %s5 = inlined_call_operand.vmem [shape: f32[1,3,2], index: 5, kind: input, shape index: {}]
  %s6 = inlined_call_operand.hbm [shape: f32[8,16,16], index: 6, kind: output, shape index: {0}]
  %s7 = inlined_call_operand.vmem [shape: f32[8,3,2], index: 7, kind: output, shape index: {1}]
  %8 = xla_tuple %s6, %s7
  %s9 = sld [smem:[#allocation0]]
  $region65: #{tpu_custom_call.1} parent=0
    _
  %s11 = ssub.s32 1, %s9
  %s12 = scalar_select 0, %s11, %s9
  $region1: #{tpu_custom_call.1} parent=0
    #allocation2 [shape = 'u8[65536]{0}', space=vmem, size = 0x10000, scoped, tag = 'output window, operand 0']
    #allocation3 [shape = 's32[2]{0}', space=sflag, size = 0x8, scoped, tag = 'scoped memory for tpu_custom_call.1']
    %13 = vsyncpa [#allocation3], 0
    %s14 = scalar_lea.sflag [#allocation3], 1
    %15 = vsyncpa %s14, 0
    loop: start=0, step=1, limit=4
    $region2: #{tpu_custom_call.1} parent=1 // loop_pre_header
      _
    $region3: #{tpu_custom_call.1} parent=1 // loop_header
      %s17 = sphi 0, %s21
      %p18 = scmp.ge.s32.totalorder %s17, 4
      %s27 = sphi 0, %s29
      %s30 = sphi 0, %s27
      %s31 = sphi 0, %s30
      %s47 = sphi 0, %s31
      %s51 = sphi 0, %s51
      %s53 = sphi 0, %s51
      %s54 = sphi 0, %s53
      %s68 = sphi 0, %s54
      %s72 = sphi 0, %s72
      %s74 = sphi 0, %s72
      %s75 = sphi 0, %s74
      %s89 = sphi 0, %s75
      %s93 = sphi 0, %s93
      %s95 = sphi 0, %s93
      %s96 = sphi 0, %s95
      %s110 = sphi 0, %s96
      %s114 = sphi 0, %s114
      %s116 = sphi 0, %s114
      %s117 = sphi 0, %s116
      %s131 = sphi 0, %s117
      %s135 = sphi 0, %s135
      %s137 = sphi 0, %s135
      %s138 = sphi 0, %s137
      %s152 = sphi 0, %s138
      %s158 = sphi 0, %s160
      %s161 = sphi 0, %s158
      %s162 = sphi 0, %s161
      %s178 = sphi 0, %s162
      %s184 = sphi 0, %s186
      %s187 = sphi 0, %s184
      %s188 = sphi 0, %s187
      %s204 = sphi 0, %s188
    $region4: #{tpu_custom_call.1} parent=1 // loop_header_branch
      %20 = sbr.rel (%p18) target = $region8
    $region5: #{tpu_custom_call.1} parent=1 // loop_body
      %s22 = ssub.s32 %s17, 1
      %s23 = ssub.s32 %s17, 2
      %s24 = sadd.s32 %s17, 1
      %s25 = ssub.s32 %s17, %s24
      %p26 = scmp.eq.s32.totalorder %s25, 0
      %s28 = sadd.s32 %s27, 1
      %s29 = scalar_select %p26, %s27, %s28
      %p32 = pneg %p26
      %p33 = scmp.eq.s32.totalorder %s17, 1
      %p34 = por %p32, %p33
      %p35 = scmp.ne.s32.totalorder %s27, %s30
      %p36 = scmp.eq.s32.totalorder %s17, 0
      %p37 = por %p35, %p36
      %p38 = scmp.ne.s32.totalorder %s27, %s30
      %p39 = scmp.eq.s32.totalorder %s22, 1
      %p40 = por %p38, %p39
      %p41 = scmp.ne.s32.totalorder %s30, %s31
      %p42 = scmp.eq.s32.totalorder %s22, 0
      %p43 = por %p41, %p42
      %p44 = scmp.ne.s32.totalorder %s30, %s31
      %p45 = scmp.eq.s32.totalorder %s23, 1
      %p46 = por %p44, %p45
      %p48 = scmp.ne.s32.totalorder %s31, %s47
      %p49 = scmp.eq.s32.totalorder %s23, 0
      %p50 = por %p48, %p49
      %s52 = sadd.s32 %s51, 1
      %p55 = scmp.eq.s32.totalorder %s17, 1
      %p56 = scmp.ne.s32.totalorder %s51, %s53
      %p57 = scmp.eq.s32.totalorder %s17, 0
      %p58 = por %p56, %p57
      %p59 = scmp.ne.s32.totalorder %s51, %s53
      %p60 = scmp.eq.s32.totalorder %s22, 1
      %p61 = por %p59, %p60
      %p62 = scmp.ne.s32.totalorder %s53, %s54
      %p63 = scmp.eq.s32.totalorder %s22, 0
      %p64 = por %p62, %p63
      %p65 = scmp.ne.s32.totalorder %s53, %s54
      %p66 = scmp.eq.s32.totalorder %s23, 1
      %p67 = por %p65, %p66
      %p69 = scmp.ne.s32.totalorder %s54, %s68
      %p70 = scmp.eq.s32.totalorder %s23, 0
      %p71 = por %p69, %p70
      %s73 = sadd.s32 %s72, 1
      %p76 = scmp.eq.s32.totalorder %s17, 1
      %p77 = scmp.ne.s32.totalorder %s72, %s74
      %p78 = scmp.eq.s32.totalorder %s17, 0
      %p79 = por %p77, %p78
      %p80 = scmp.ne.s32.totalorder %s72, %s74
      %p81 = scmp.eq.s32.totalorder %s22, 1
      %p82 = por %p80, %p81
      %p83 = scmp.ne.s32.totalorder %s74, %s75
      %p84 = scmp.eq.s32.totalorder %s22, 0
      %p85 = por %p83, %p84
      %p86 = scmp.ne.s32.totalorder %s74, %s75
      %p87 = scmp.eq.s32.totalorder %s23, 1
      %p88 = por %p86, %p87
      %p90 = scmp.ne.s32.totalorder %s75, %s89
      %p91 = scmp.eq.s32.totalorder %s23, 0
      %p92 = por %p90, %p91
      %s94 = sadd.s32 %s93, 1
      %p97 = scmp.eq.s32.totalorder %s17, 1
      %p98 = scmp.ne.s32.totalorder %s93, %s95
      %p99 = scmp.eq.s32.totalorder %s17, 0
      %p100 = por %p98, %p99
      %p101 = scmp.ne.s32.totalorder %s93, %s95
      %p102 = scmp.eq.s32.totalorder %s22, 1
      %p103 = por %p101, %p102
      %p104 = scmp.ne.s32.totalorder %s95, %s96
      %p105 = scmp.eq.s32.totalorder %s22, 0
      %p106 = por %p104, %p105
      %p107 = scmp.ne.s32.totalorder %s95, %s96
      %p108 = scmp.eq.s32.totalorder %s23, 1
      %p109 = por %p107, %p108
      %p111 = scmp.ne.s32.totalorder %s96, %s110
      %p112 = scmp.eq.s32.totalorder %s23, 0
      %p113 = por %p111, %p112
      %s115 = sadd.s32 %s114, 1
      %p118 = scmp.eq.s32.totalorder %s17, 1
      %p119 = scmp.ne.s32.totalorder %s114, %s116
      %p120 = scmp.eq.s32.totalorder %s17, 0
      %p121 = por %p119, %p120
      %p122 = scmp.ne.s32.totalorder %s114, %s116
      %p123 = scmp.eq.s32.totalorder %s22, 1
      %p124 = por %p122, %p123
      %p125 = scmp.ne.s32.totalorder %s116, %s117
      %p126 = scmp.eq.s32.totalorder %s22, 0
      %p127 = por %p125, %p126
      %p128 = scmp.ne.s32.totalorder %s116, %s117
      %p129 = scmp.eq.s32.totalorder %s23, 1
      %p130 = por %p128, %p129
      %p132 = scmp.ne.s32.totalorder %s117, %s131
      %p133 = scmp.eq.s32.totalorder %s23, 0
      %p134 = por %p132, %p133
      %s136 = sadd.s32 %s135, 1
      %p139 = scmp.eq.s32.totalorder %s17, 1
      %p140 = scmp.ne.s32.totalorder %s135, %s137
      %p141 = scmp.eq.s32.totalorder %s17, 0
      %p142 = por %p140, %p141
      %p143 = scmp.ne.s32.totalorder %s135, %s137
      %p144 = scmp.eq.s32.totalorder %s22, 1
      %p145 = por %p143, %p144
      %p146 = scmp.ne.s32.totalorder %s137, %s138
      %p147 = scmp.eq.s32.totalorder %s22, 0
      %p148 = por %p146, %p147
      %p149 = scmp.ne.s32.totalorder %s137, %s138
      %p150 = scmp.eq.s32.totalorder %s23, 1
      %p151 = por %p149, %p150
      %p153 = scmp.ne.s32.totalorder %s138, %s152
      %p154 = scmp.eq.s32.totalorder %s23, 0
      %p155 = por %p153, %p154
      %s156 = ssub.s32 %s17, %s24
      %p157 = scmp.eq.s32.totalorder %s156, 0
      %s159 = sadd.s32 %s158, 1
      %s160 = scalar_select %p157, %s158, %s159
      %p163 = pneg %p157
      %p164 = scmp.eq.s32.totalorder %s17, 1
      %p165 = por %p163, %p164
      %p166 = scmp.ne.s32.totalorder %s158, %s161
      %p167 = scmp.eq.s32.totalorder %s17, 0
      %p168 = por %p166, %p167
      %p169 = scmp.ne.s32.totalorder %s158, %s161
      %p170 = scmp.eq.s32.totalorder %s22, 1
      %p171 = por %p169, %p170
      %p172 = scmp.ne.s32.totalorder %s161, %s162
      %p173 = scmp.eq.s32.totalorder %s22, 0
      %p174 = por %p172, %p173
      %p175 = scmp.ne.s32.totalorder %s161, %s162
      %p176 = scmp.eq.s32.totalorder %s23, 1
      %p177 = por %p175, %p176
      %p179 = scmp.ne.s32.totalorder %s162, %s178
      %p180 = scmp.eq.s32.totalorder %s23, 0
      %p181 = por %p179, %p180
      %s182 = ssub.s32 %s17, %s24
      %p183 = scmp.eq.s32.totalorder %s182, 0
      %s185 = sadd.s32 %s184, 1
      %s186 = scalar_select %p183, %s184, %s185
      %p189 = pneg %p183
      %p190 = scmp.eq.s32.totalorder %s17, 1
      %p191 = por %p189, %p190
      %p192 = scmp.ne.s32.totalorder %s184, %s187
      %p193 = scmp.eq.s32.totalorder %s17, 0
      %p194 = por %p192, %p193
      %p195 = scmp.ne.s32.totalorder %s184, %s187
      %p196 = scmp.eq.s32.totalorder %s22, 1
      %p197 = por %p195, %p196
      %p198 = scmp.ne.s32.totalorder %s187, %s188
      %p199 = scmp.eq.s32.totalorder %s22, 0
      %p200 = por %p198, %p199
      %p201 = scmp.ne.s32.totalorder %s187, %s188
      %p202 = scmp.eq.s32.totalorder %s23, 1
      %p203 = por %p201, %p202
      %p205 = scmp.ne.s32.totalorder %s188, %s204
      %p206 = scmp.eq.s32.totalorder %s23, 0
      %p207 = por %p205, %p206
      %p208 = scmp.le.s32.totalorder 1, %s17
      %p209 = scmp.lt.s32.totalorder %s17, 3
      %p210 = pnand %p208, %p209
      %p211 = pneg %p210
      // Predicated region
      $region9: #{tpu_custom_call.1} parent=5 // pred_check
        _
      $region10: #{tpu_custom_call.1} parent=5 // pred_check_branch
        %213 = sbr.rel (%p210) target = $region12
      $region11: #{tpu_custom_call.1} parent=5 // pred_region
        %s214 = ssub.s32 %s17, 1
        // Predicated region
        $region13: #{tpu_custom_call.1} parent=11 // pred_check
          %p215 = pneg %p64
        $region14: #{tpu_custom_call.1} parent=11 // pred_check_branch
          %217 = sbr.rel (%p215) target = $region16
        $region15: #{tpu_custom_call.1} parent=11 // pred_region
          _
        $region16: #{tpu_custom_call.1} parent=11 // pred_fallthru
          _
        // Predicated region
        $region17: #{tpu_custom_call.1} parent=11 // pred_check
          %p218 = pneg %p85
        $region18: #{tpu_custom_call.1} parent=11 // pred_check_branch
          %220 = sbr.rel (%p218) target = $region20
        $region19: #{tpu_custom_call.1} parent=11 // pred_region
          _
        $region20: #{tpu_custom_call.1} parent=11 // pred_fallthru
          _
        // Predicated region
        $region21: #{tpu_custom_call.1} parent=11 // pred_check
          %p221 = pneg %p106
        $region22: #{tpu_custom_call.1} parent=11 // pred_check_branch
          %223 = sbr.rel (%p221) target = $region24
        $region23: #{tpu_custom_call.1} parent=11 // pred_region
          _
        $region24: #{tpu_custom_call.1} parent=11 // pred_fallthru
          _
        // Predicated region
        $region25: #{tpu_custom_call.1} parent=11 // pred_check
          %p224 = pneg %p127
        $region26: #{tpu_custom_call.1} parent=11 // pred_check_branch
          %226 = sbr.rel (%p224) target = $region28
        $region27: #{tpu_custom_call.1} parent=11 // pred_region
          _
        $region28: #{tpu_custom_call.1} parent=11 // pred_fallthru
          _
        // Predicated region
        $region29: #{tpu_custom_call.1} parent=11 // pred_check
          %p227 = pneg %p148
        $region30: #{tpu_custom_call.1} parent=11 // pred_check_branch
          %229 = sbr.rel (%p227) target = $region32
        $region31: #{tpu_custom_call.1} parent=11 // pred_region
          _
        $region32: #{tpu_custom_call.1} parent=11 // pred_fallthru
          _
      $region12: #{tpu_custom_call.1} parent=5 // pred_fallthru
        _
      %p230 = scmp.lt.s32.totalorder %s17, 2
      // Predicated region
      $region33: #{tpu_custom_call.1} parent=5 // pred_check
        %p231 = pneg %p230
      $region34: #{tpu_custom_call.1} parent=5 // pred_check_branch
        %233 = sbr.rel (%p231) target = $region36
      $region35: #{tpu_custom_call.1} parent=5 // pred_region
        // Predicated region
        $region37: #{tpu_custom_call.1} parent=35 // pred_check
          %p234 = pneg %p37
        $region38: #{tpu_custom_call.1} parent=35 // pred_check_branch
          %236 = sbr.rel (%p234) target = $region40
        $region39: #{tpu_custom_call.1} parent=35 // pred_region
          %s237 = smul.u32 4, %s17
          %p238 = scmp.lt.s32.totalorder %s237, 7
          %s239 = scalar_select %p238, %s237, 7
          %s240 = smul.addr %s239, 2
          %s241 = smul.addr %s240, 8
          %s242 = scalar_lea.vmem %s0, %s241
          %s243 = smul.u32 4, %s17
        $region40: #{tpu_custom_call.1} parent=35 // pred_fallthru
          _
      $region36: #{tpu_custom_call.1} parent=5 // pred_fallthru
        _
      %p244 = scmp.le.s32.totalorder 1, %s17
      %p245 = scmp.lt.s32.totalorder %s17, 3
      %p246 = pnand %p244, %p245
      %p247 = pneg %p246
      // Predicated region
      $region41: #{tpu_custom_call.1} parent=5 // pred_check
        _
      $region42: #{tpu_custom_call.1} parent=5 // pred_check_branch
        %249 = sbr.rel (%p246) target = $region44
      $region43: #{tpu_custom_call.1} parent=5 // pred_region
        %s250 = ssub.s32 %s17, 1
        %s251 = smul.u32 4, %s22
        %p252 = scmp.lt.s32.totalorder %s251, 7
        %s253 = scalar_select %p252, %s251, 7
        %s254 = smul.addr %s253, 2
        %s255 = smul.addr %s254, 8
        %s256 = scalar_lea.vmem %s0, %s255
        %p257 = pneg %p43
        %p258 = pneg %p40
        %p259 = pneg %p64
        %p260 = pneg %p61
        %p261 = pneg %p85
        %p262 = pneg %p82
        %p263 = pneg %p106
        %p264 = pneg %p103
        %p265 = pneg %p127
        %p266 = pneg %p124
        %p267 = pneg %p148
        %p268 = pneg %p145
        %p269 = pneg %p174
        %p270 = pneg %p171
        %s271 = sand.u32 %s161, 1
        %s272 = scalar_lea.sflag [#allocation3], %s271
        %s273 = sand.u32 %s161, 1
        %s274 = smul.addr %s273, 64
        %s275 = scalar_lea.vmem [#allocation2], %s274
        %p276 = pneg %p200
        %p277 = pneg %p197
        %s278 = smul.u32 4, %s22
        %p279 = scmp.lt.s32.totalorder %s278, 7
        %s280 = scalar_select %p279, %s278, 7
        %s281 = smul.addr %s280, 4
        %s282 = scalar_lea.vmem %s7, %s281
        %s283 = smul.u32 4, %s22
        %p284 = scmp.lt.s32.totalorder %s283, 7
        %s285 = scalar_select %p284, %s283, 7
        %s286 = smul.addr %s285, 2
        %s287 = smul.addr %s286, 8
        %s288 = scalar_lea.vmem %s0, %s287
        %s289 = smul.u32 4, %s22
        %s290 = smul.u32 4, %s22
        %s291 = smul.u32 4, %s22
        %p292 = scmp.lt.s32.totalorder %s291, 7
        %s293 = scalar_select %p292, %s291, 7
        %s294 = smul.addr %s293, 4
        %s295 = scalar_lea.vmem %s7, %s294
        %s296 = smul.u32 4, %s22
        %v297 = vld [vmem:[%s288] sm:$0xff]
        %v298 = vld [vmem:[%s288 + $0x8] sm:$0xff]
        %v299 = vld [vmem:[%s288 + $0x10] sm:$0xff]
        %v300 = vld [vmem:[%s288 + $0x18] sm:$0xff]
        %v301 = vld [vmem:[%s288 + $0x20] sm:$0xff]
        %v302 = vld [vmem:[%s288 + $0x28] sm:$0xff]
        %v303 = vld [vmem:[%s288 + $0x30] sm:$0xff]
        %v304 = vld [vmem:[%s288 + $0x38] sm:$0xff]
        %v305 = vld [vmem:[%s1] sm:$0xff]
        %v306 = vld [vmem:[%s1 + $0x8] sm:$0xff]
        %vm307 = vcmask 130048
        %v309 = vsel %vm307, %v297, 0
        %v312 = vsel %vm307, %v298, 0
        %v315 = vsel %vm307, %v299, 0
        %v318 = vsel %vm307, %v300, 0
        %v321 = vsel %vm307, %v301, 0
        %v324 = vsel %vm307, %v302, 0
        %v327 = vsel %vm307, %v303, 0
        %v330 = vsel %vm307, %v304, 0
        %332 = vmatprep.subr.mxu0 0.0
        %333 = vmatpush1.msra.mxu0 %v305
        %334 = vmatprep.subr.mxu0 0.0
        %335 = vmatpush1.msra.mxu0 %v306
        %336 = vmatprep.subr.mxu0 0.0
        %337 = vmatpush1.msra.mxu0 0.0
        %338 = vmatprep.subr.mxu0 0.0
        %339 = vmatpush1.msra.mxu0 0.0
        %340 = vmatprep.subr.mxu0 0.0
        %341 = vmatpush1.msra.mxu0 0.0
        %342 = vmatprep.subr.mxu0 0.0
        %343 = vmatpush1.msra.mxu0 0.0
        %344 = vmatprep.subr.mxu0 0.0
        %345 = vmatpush1.msra.mxu0 0.0
        %346 = vmatprep.subr.mxu0 0.0
        %347 = vmatpush1.msra.mxu0 0.0
        %348 = vmatprep.subr.mxu0 0.0
        %349 = vmatpush1.msra.mxu0 0.0
        %350 = vmatprep.subr.mxu0 0.0
        %351 = vmatpush1.msra.mxu0 0.0
        %352 = vmatprep.subr.mxu0 0.0
        %353 = vmatpush1.msra.mxu0 0.0
        %354 = vmatprep.subr.mxu0 0.0
        %355 = vmatpush1.msra.mxu0 0.0
        %356 = vmatprep.subr.mxu0 0.0
        %357 = vmatpush1.msra.mxu0 0.0
        %358 = vmatprep.subr.mxu0 0.0
        %359 = vmatpush1.msra.mxu0 0.0
        %360 = vmatprep.subr.mxu0 0.0
        %361 = vmatpush1.msra.mxu0 0.0
        %362 = vmatprep.subr.mxu0 0.0
        %363 = vmatpush1.msra.mxu0 0.0
        %364 = vmatprep.subr.mxu0 0.0
        %365 = vmatpush1.msra.mxu0 0.0
        %366 = vmatprep.subr.mxu0 0.0
        %367 = vmatpush1.msra.mxu0 0.0
        %368 = vmatprep.subr.mxu0 0.0
        %369 = vmatpush1.msra.mxu0 0.0
        %370 = vmatprep.subr.mxu0 0.0
        %371 = vmatpush1.msra.mxu0 0.0
        %372 = vmatprep.subr.mxu0 0.0
        %373 = vmatpush1.msra.mxu0 0.0
        %374 = vmatprep.subr.mxu0 0.0
        %375 = vmatpush1.msra.mxu0 0.0
        %376 = vmatprep.subr.mxu0 0.0
        %377 = vmatpush1.msra.mxu0 0.0
        %378 = vmatprep.subr.mxu0 0.0
        %379 = vmatpush1.msra.mxu0 0.0
        %380 = vmatprep.subr.mxu0 0.0
        %381 = vmatpush1.msra.mxu0 0.0
        %382 = vmatprep.subr.mxu0 0.0
        %383 = vmatpush1.msra.mxu0 0.0
        %384 = vmatprep.subr.mxu0 0.0
        %385 = vmatpush1.msra.mxu0 0.0
        %386 = vmatprep.subr.mxu0 0.0
        %387 = vmatpush1.msra.mxu0 0.0
        %388 = vmatprep.subr.mxu0 0.0
        %389 = vmatpush1.msra.mxu0 0.0
        %390 = vmatprep.subr.mxu0 0.0
        %391 = vmatpush1.msra.mxu0 0.0
        %392 = vmatprep.subr.mxu0 0.0
        %393 = vmatpush1.msra.mxu0 0.0
        %394 = vmatprep.subr.mxu0 0.0
        %395 = vmatpush1.msra.mxu0 0.0
        %396 = vmatprep.mubr.f32.mxu0 0.0
        %397 = vmatmul.mubr.f32.gmra.mrb[0].mxu0 %v309
        %v398 = vpop.f32.mrb[0].mxu0
        %v399 = vadd.f32 0.0, %v398
        %v400 = vpop.f32.mrb[0].mxu0
        %401 = vmatprep.mubr.f32.mxu0 0.0
        %402 = vmatmul.mubr.f32.gmra.mrb[0].mxu0 %v312
        %v403 = vpop.f32.mrb[0].mxu0
        %v404 = vadd.f32 0.0, %v403
        %v405 = vpop.f32.mrb[0].mxu0
        %406 = vmatprep.mubr.f32.mxu0 0.0
        %407 = vmatmul.mubr.f32.gmra.mrb[0].mxu0 %v315
        %v408 = vpop.f32.mrb[0].mxu0
        %v409 = vadd.f32 0.0, %v408
        %v410 = vpop.f32.mrb[0].mxu0
        %411 = vmatprep.mubr.f32.mxu0 0.0
        %412 = vmatmul.mubr.f32.gmra.mrb[0].mxu0 %v318
        %v413 = vpop.f32.mrb[0].mxu0
        %v414 = vadd.f32 0.0, %v413
        %v415 = vpop.f32.mrb[0].mxu0
        %416 = vmatprep.mubr.f32.mxu0 0.0
        %417 = vmatmul.mubr.f32.gmra.mrb[0].mxu0 %v321
        %v418 = vpop.f32.mrb[0].mxu0
        %v419 = vadd.f32 0.0, %v418
        %v420 = vpop.f32.mrb[0].mxu0
        %421 = vmatprep.mubr.f32.mxu0 0.0
        %422 = vmatmul.mubr.f32.gmra.mrb[0].mxu0 %v324
        %v423 = vpop.f32.mrb[0].mxu0
        %v424 = vadd.f32 0.0, %v423
        %v425 = vpop.f32.mrb[0].mxu0
        %426 = vmatprep.mubr.f32.mxu0 0.0
        %427 = vmatmul.mubr.f32.gmra.mrb[0].mxu0 %v327
        %v428 = vpop.f32.mrb[0].mxu0
        %v429 = vadd.f32 0.0, %v428
        %v430 = vpop.f32.mrb[0].mxu0
        %431 = vmatprep.mubr.f32.mxu0 0.0
        %432 = vmatmul.mubr.f32.gmra.mrb[0].mxu0 %v330
        %v433 = vpop.f32.mrb[0].mxu0
        %v434 = vadd.f32 0.0, %v433
        %v435 = vpop.f32.mrb[0].mxu0
        %436 = vdwg.mxu0
        %v437 = vld [vmem:[%s2] sm:$0x7]
        %v438 = vld [vmem:[%s2 + $0x4] sm:$0x7]
        %v439 = vld [vmem:[%s2 + $0x8] sm:$0x7]
        %v440 = vld [vmem:[%s2 + $0xc] sm:$0x7]
        %v442 = vsel %vm307, %v437, 0
        %444 = vmatprep.subr.mxu0 0.0
        %445 = vmatpush1.msra.mxu0 %v399
        %446 = vmatprep.subr.mxu0 0.0
        %447 = vmatpush1.msra.mxu0 %v404
        %448 = vmatprep.subr.mxu0 0.0
        %449 = vmatpush1.msra.mxu0 0.0
        %450 = vmatprep.subr.mxu0 0.0
        %451 = vmatpush1.msra.mxu0 0.0
        %452 = vmatprep.subr.mxu0 0.0
        %453 = vmatpush1.msra.mxu0 0.0
        %454 = vmatprep.subr.mxu0 0.0
        %455 = vmatpush1.msra.mxu0 0.0
        %456 = vmatprep.subr.mxu0 0.0
        %457 = vmatpush1.msra.mxu0 0.0
        %458 = vmatprep.subr.mxu0 0.0
        %459 = vmatpush1.msra.mxu0 0.0
        %460 = vmatprep.subr.mxu0 0.0
        %461 = vmatpush1.msra.mxu0 0.0
        %462 = vmatprep.subr.mxu0 0.0
        %463 = vmatpush1.msra.mxu0 0.0
        %464 = vmatprep.subr.mxu0 0.0
        %465 = vmatpush1.msra.mxu0 0.0
        %466 = vmatprep.subr.mxu0 0.0
        %467 = vmatpush1.msra.mxu0 0.0
        %468 = vmatprep.subr.mxu0 0.0
        %469 = vmatpush1.msra.mxu0 0.0
        %470 = vmatprep.subr.mxu0 0.0
        %471 = vmatpush1.msra.mxu0 0.0
        %472 = vmatprep.subr.mxu0 0.0
        %473 = vmatpush1.msra.mxu0 0.0
        %474 = vmatprep.subr.mxu0 0.0
        %475 = vmatpush1.msra.mxu0 0.0
        %476 = vmatprep.subr.mxu0 0.0
        %477 = vmatpush1.msra.mxu0 0.0
        %478 = vmatprep.subr.mxu0 0.0
        %479 = vmatpush1.msra.mxu0 0.0
        %480 = vmatprep.subr.mxu0 0.0
        %481 = vmatpush1.msra.mxu0 0.0
        %482 = vmatprep.subr.mxu0 0.0
        %483 = vmatpush1.msra.mxu0 0.0
        %484 = vmatprep.subr.mxu0 0.0
        %485 = vmatpush1.msra.mxu0 0.0
        %486 = vmatprep.subr.mxu0 0.0
        %487 = vmatpush1.msra.mxu0 0.0
        %488 = vmatprep.subr.mxu0 0.0
        %489 = vmatpush1.msra.mxu0 0.0
        %490 = vmatprep.subr.mxu0 0.0
        %491 = vmatpush1.msra.mxu0 0.0
        %492 = vmatprep.subr.mxu0 0.0
        %493 = vmatpush1.msra.mxu0 0.0
        %494 = vmatprep.subr.mxu0 0.0
        %495 = vmatpush1.msra.mxu0 0.0
        %496 = vmatprep.subr.mxu0 0.0
        %497 = vmatpush1.msra.mxu0 0.0
        %498 = vmatprep.subr.mxu0 0.0
        %499 = vmatpush1.msra.mxu0 0.0
        %500 = vmatprep.subr.mxu0 0.0
        %501 = vmatpush1.msra.mxu0 0.0
        %502 = vmatprep.subr.mxu0 0.0
        %503 = vmatpush1.msra.mxu0 0.0
        %504 = vmatprep.subr.mxu0 0.0
        %505 = vmatpush1.msra.mxu0 0.0
        %506 = vmatprep.subr.mxu0 0.0
        %507 = vmatpush1.msra.mxu0 0.0
        %508 = vmatprep.mubr.f32.mxu0 0.0
        %509 = vmatmul.mubr.f32.gmra.mrb[0].mxu0 %v442
        %v510 = vpop.f32.mrb[0].mxu0
        %v511 = vadd.f32 0.0, %v510
        %v512 = vpop.f32.mrb[0].mxu0
        %513 = vdwg.mxu0
        %v515 = vsel %vm307, %v438, 0
        %517 = vmatprep.subr.mxu0 0.0
        %518 = vmatpush1.msra.mxu0 %v409
        %519 = vmatprep.subr.mxu0 0.0
        %520 = vmatpush1.msra.mxu0 %v414
        %521 = vmatprep.subr.mxu0 0.0
        %522 = vmatpush1.msra.mxu0 0.0
        %523 = vmatprep.subr.mxu0 0.0
        %524 = vmatpush1.msra.mxu0 0.0
        %525 = vmatprep.subr.mxu0 0.0
        %526 = vmatpush1.msra.mxu0 0.0
        %527 = vmatprep.subr.mxu0 0.0
        %528 = vmatpush1.msra.mxu0 0.0
        %529 = vmatprep.subr.mxu0 0.0
        %530 = vmatpush1.msra.mxu0 0.0
        %531 = vmatprep.subr.mxu0 0.0
        %532 = vmatpush1.msra.mxu0 0.0
        %533 = vmatprep.subr.mxu0 0.0
        %534 = vmatpush1.msra.mxu0 0.0
        %535 = vmatprep.subr.mxu0 0.0
        %536 = vmatpush1.msra.mxu0 0.0
        %537 = vmatprep.subr.mxu0 0.0
        %538 = vmatpush1.msra.mxu0 0.0
        %539 = vmatprep.subr.mxu0 0.0
        %540 = vmatpush1.msra.mxu0 0.0
        %541 = vmatprep.subr.mxu0 0.0
        %542 = vmatpush1.msra.mxu0 0.0
        %543 = vmatprep.subr.mxu0 0.0
        %544 = vmatpush1.msra.mxu0 0.0
        %545 = vmatprep.subr.mxu0 0.0
        %546 = vmatpush1.msra.mxu0 0.0
        %547 = vmatprep.subr.mxu0 0.0
        %548 = vmatpush1.msra.mxu0 0.0
        %549 = vmatprep.subr.mxu0 0.0
        %550 = vmatpush1.msra.mxu0 0.0
        %551 = vmatprep.subr.mxu0 0.0
        %552 = vmatpush1.msra.mxu0 0.0
        %553 = vmatprep.subr.mxu0 0.0
        %554 = vmatpush1.msra.mxu0 0.0
        %555 = vmatprep.subr.mxu0 0.0
        %556 = vmatpush1.msra.mxu0 0.0
        %557 = vmatprep.subr.mxu0 0.0
        %558 = vmatpush1.msra.mxu0 0.0
        %559 = vmatprep.subr.mxu0 0.0
        %560 = vmatpush1.msra.mxu0 0.0
        %561 = vmatprep.subr.mxu0 0.0
        %562 = vmatpush1.msra.mxu0 0.0
        %563 = vmatprep.subr.mxu0 0.0
        %564 = vmatpush1.msra.mxu0 0.0
        %565 = vmatprep.subr.mxu0 0.0
        %566 = vmatpush1.msra.mxu0 0.0
        %567 = vmatprep.subr.mxu0 0.0
        %568 = vmatpush1.msra.mxu0 0.0
        %569 = vmatprep.subr.mxu0 0.0
        %570 = vmatpush1.msra.mxu0 0.0
        %571 = vmatprep.subr.mxu0 0.0
        %572 = vmatpush1.msra.mxu0 0.0
        %573 = vmatprep.subr.mxu0 0.0
        %574 = vmatpush1.msra.mxu0 0.0
        %575 = vmatprep.subr.mxu0 0.0
        %576 = vmatpush1.msra.mxu0 0.0
        %577 = vmatprep.subr.mxu0 0.0
        %578 = vmatpush1.msra.mxu0 0.0
        %579 = vmatprep.subr.mxu0 0.0
        %580 = vmatpush1.msra.mxu0 0.0
        %581 = vmatprep.mubr.f32.mxu0 0.0
        %582 = vmatmul.mubr.f32.gmra.mrb[0].mxu0 %v515
        %v583 = vpop.f32.mrb[0].mxu0
        %v584 = vadd.f32 0.0, %v583
        %v585 = vpop.f32.mrb[0].mxu0
        %586 = vdwg.mxu0
        %v588 = vsel %vm307, %v439, 0
        %590 = vmatprep.subr.mxu0 0.0
        %591 = vmatpush1.msra.mxu0 %v419
        %592 = vmatprep.subr.mxu0 0.0
        %593 = vmatpush1.msra.mxu0 %v424
        %594 = vmatprep.subr.mxu0 0.0
        %595 = vmatpush1.msra.mxu0 0.0
        %596 = vmatprep.subr.mxu0 0.0
        %597 = vmatpush1.msra.mxu0 0.0
        %598 = vmatprep.subr.mxu0 0.0
        %599 = vmatpush1.msra.mxu0 0.0
        %600 = vmatprep.subr.mxu0 0.0
        %601 = vmatpush1.msra.mxu0 0.0
        %602 = vmatprep.subr.mxu0 0.0
        %603 = vmatpush1.msra.mxu0 0.0
        %604 = vmatprep.subr.mxu0 0.0
        %605 = vmatpush1.msra.mxu0 0.0
        %606 = vmatprep.subr.mxu0 0.0
        %607 = vmatpush1.msra.mxu0 0.0
        %608 = vmatprep.subr.mxu0 0.0
        %609 = vmatpush1.msra.mxu0 0.0
        %610 = vmatprep.subr.mxu0 0.0
        %611 = vmatpush1.msra.mxu0 0.0
        %612 = vmatprep.subr.mxu0 0.0
        %613 = vmatpush1.msra.mxu0 0.0
        %614 = vmatprep.subr.mxu0 0.0
        %615 = vmatpush1.msra.mxu0 0.0
        %616 = vmatprep.subr.mxu0 0.0
        %617 = vmatpush1.msra.mxu0 0.0
        %618 = vmatprep.subr.mxu0 0.0
        %619 = vmatpush1.msra.mxu0 0.0
        %620 = vmatprep.subr.mxu0 0.0
        %621 = vmatpush1.msra.mxu0 0.0
        %622 = vmatprep.subr.mxu0 0.0
        %623 = vmatpush1.msra.mxu0 0.0
        %624 = vmatprep.subr.mxu0 0.0
        %625 = vmatpush1.msra.mxu0 0.0
        %626 = vmatprep.subr.mxu0 0.0
        %627 = vmatpush1.msra.mxu0 0.0
        %628 = vmatprep.subr.mxu0 0.0
        %629 = vmatpush1.msra.mxu0 0.0
        %630 = vmatprep.subr.mxu0 0.0
        %631 = vmatpush1.msra.mxu0 0.0
        %632 = vmatprep.subr.mxu0 0.0
        %633 = vmatpush1.msra.mxu0 0.0
        %634 = vmatprep.subr.mxu0 0.0
        %635 = vmatpush1.msra.mxu0 0.0
        %636 = vmatprep.subr.mxu0 0.0
        %637 = vmatpush1.msra.mxu0 0.0
        %638 = vmatprep.subr.mxu0 0.0
        %639 = vmatpush1.msra.mxu0 0.0
        %640 = vmatprep.subr.mxu0 0.0
        %641 = vmatpush1.msra.mxu0 0.0
        %642 = vmatprep.subr.mxu0 0.0
        %643 = vmatpush1.msra.mxu0 0.0
        %644 = vmatprep.subr.mxu0 0.0
        %645 = vmatpush1.msra.mxu0 0.0
        %646 = vmatprep.subr.mxu0 0.0
        %647 = vmatpush1.msra.mxu0 0.0
        %648 = vmatprep.subr.mxu0 0.0
        %649 = vmatpush1.msra.mxu0 0.0
        %650 = vmatprep.subr.mxu0 0.0
        %651 = vmatpush1.msra.mxu0 0.0
        %652 = vmatprep.subr.mxu0 0.0
        %653 = vmatpush1.msra.mxu0 0.0
        %654 = vmatprep.mubr.f32.mxu0 0.0
        %655 = vmatmul.mubr.f32.gmra.mrb[0].mxu0 %v588
        %v656 = vpop.f32.mrb[0].mxu0
        %v657 = vadd.f32 0.0, %v656
        %v658 = vpop.f32.mrb[0].mxu0
        %659 = vdwg.mxu0
        %v661 = vsel %vm307, %v440, 0
        %663 = vmatprep.subr.mxu0 0.0
        %664 = vmatpush1.msra.mxu0 %v429
        %665 = vmatprep.subr.mxu0 0.0
        %666 = vmatpush1.msra.mxu0 %v434
        %667 = vmatprep.subr.mxu0 0.0
        %668 = vmatpush1.msra.mxu0 0.0
        %669 = vmatprep.subr.mxu0 0.0
        %670 = vmatpush1.msra.mxu0 0.0
        %671 = vmatprep.subr.mxu0 0.0
        %672 = vmatpush1.msra.mxu0 0.0
        %673 = vmatprep.subr.mxu0 0.0
        %674 = vmatpush1.msra.mxu0 0.0
        %675 = vmatprep.subr.mxu0 0.0
        %676 = vmatpush1.msra.mxu0 0.0
        %677 = vmatprep.subr.mxu0 0.0
        %678 = vmatpush1.msra.mxu0 0.0
        %679 = vmatprep.subr.mxu0 0.0
        %680 = vmatpush1.msra.mxu0 0.0
        %681 = vmatprep.subr.mxu0 0.0
        %682 = vmatpush1.msra.mxu0 0.0
        %683 = vmatprep.subr.mxu0 0.0
        %684 = vmatpush1.msra.mxu0 0.0
        %685 = vmatprep.subr.mxu0 0.0
        %686 = vmatpush1.msra.mxu0 0.0
        %687 = vmatprep.subr.mxu0 0.0
        %688 = vmatpush1.msra.mxu0 0.0
        %689 = vmatprep.subr.mxu0 0.0
        %690 = vmatpush1.msra.mxu0 0.0
        %691 = vmatprep.subr.mxu0 0.0
        %692 = vmatpush1.msra.mxu0 0.0
        %693 = vmatprep.subr.mxu0 0.0
        %694 = vmatpush1.msra.mxu0 0.0
        %695 = vmatprep.subr.mxu0 0.0
        %696 = vmatpush1.msra.mxu0 0.0
        %697 = vmatprep.subr.mxu0 0.0
        %698 = vmatpush1.msra.mxu0 0.0
        %699 = vmatprep.subr.mxu0 0.0
        %700 = vmatpush1.msra.mxu0 0.0
        %701 = vmatprep.subr.mxu0 0.0
        %702 = vmatpush1.msra.mxu0 0.0
        %703 = vmatprep.subr.mxu0 0.0
        %704 = vmatpush1.msra.mxu0 0.0
        %705 = vmatprep.subr.mxu0 0.0
        %706 = vmatpush1.msra.mxu0 0.0
        %707 = vmatprep.subr.mxu0 0.0
        %708 = vmatpush1.msra.mxu0 0.0
        %709 = vmatprep.subr.mxu0 0.0
        %710 = vmatpush1.msra.mxu0 0.0
        %711 = vmatprep.subr.mxu0 0.0
        %712 = vmatpush1.msra.mxu0 0.0
        %713 = vmatprep.subr.mxu0 0.0
        %714 = vmatpush1.msra.mxu0 0.0
        %715 = vmatprep.subr.mxu0 0.0
        %716 = vmatpush1.msra.mxu0 0.0
        %717 = vmatprep.subr.mxu0 0.0
        %718 = vmatpush1.msra.mxu0 0.0
        %719 = vmatprep.subr.mxu0 0.0
        %720 = vmatpush1.msra.mxu0 0.0
        %721 = vmatprep.subr.mxu0 0.0
        %722 = vmatpush1.msra.mxu0 0.0
        %723 = vmatprep.subr.mxu0 0.0
        %724 = vmatpush1.msra.mxu0 0.0
        %725 = vmatprep.subr.mxu0 0.0
        %726 = vmatpush1.msra.mxu0 0.0
        %727 = vmatprep.mubr.f32.mxu0 0.0
        %728 = vmatmul.mubr.f32.gmra.mrb[0].mxu0 %v661
        %v729 = vpop.f32.mrb[0].mxu0
        %v730 = vadd.f32 0.0, %v729
        %v731 = vpop.f32.mrb[0].mxu0
        %732 = vdwg.mxu0
        %v733 = vld [vmem:[%s5] sm:$0x7]
        %v734 = vmul.f32 %v511, %v733
        %v735 = vmul.f32 %v584, %v733
        %v736 = vmul.f32 %v657, %v733
        %v737 = vmul.f32 %v730, %v733
        %vm738 = vcmask 10240
        %739 = vst.msk [vmem:[%s295] sm:$0x7] %vm738, %v734
        %740 = vst.msk [vmem:[%s295 + $0x4] sm:$0x7] %vm738, %v735
        %741 = vst.msk [vmem:[%s295 + $0x8] sm:$0x7] %vm738, %v736
        %742 = vst.msk [vmem:[%s295 + $0xc] sm:$0x7] %vm738, %v737
        %v743 = vld [vmem:[%s3] sm:$0xff]
        %v744 = vld [vmem:[%s3 + $0x8] sm:$0xff]
        %v745 = vld [vmem:[%s3 + $0x10] sm:$0xff]
        %v746 = vld [vmem:[%s3 + $0x18] sm:$0xff]
        %v747 = vld [vmem:[%s3 + $0x20] sm:$0xff]
        %v748 = vld [vmem:[%s3 + $0x28] sm:$0xff]
        %v749 = vld [vmem:[%s3 + $0x30] sm:$0xff]
        %v750 = vld [vmem:[%s3 + $0x38] sm:$0xff]
        %vm751 = vcmask 23552
        %v753 = vsel %vm751, %v743, 0
        %v756 = vsel %vm751, %v744, 0
        %vm758 = vcmask 1042432
        %v760 = vsel %vm758, %v734, 0
        %762 = vmatprep.subr.mxu0 0.0
        %763 = vmatpush1.msra.mxu0 %v760
        %764 = vmatprep.subr.mxu0 0.0
        %765 = vmatpush1.msra.mxu0 0.0
        %766 = vmatprep.subr.mxu0 0.0
        %767 = vmatpush1.msra.mxu0 0.0
        %768 = vmatprep.subr.mxu0 0.0
        %769 = vmatpush1.msra.mxu0 0.0
        %770 = vmatprep.subr.mxu0 0.0
        %771 = vmatpush1.msra.mxu0 0.0
        %772 = vmatprep.subr.mxu0 0.0
        %773 = vmatpush1.msra.mxu0 0.0
        %774 = vmatprep.subr.mxu0 0.0
        %775 = vmatpush1.msra.mxu0 0.0
        %776 = vmatprep.subr.mxu0 0.0
        %777 = vmatpush1.msra.mxu0 0.0
        %778 = vmatprep.subr.mxu0 0.0
        %779 = vmatpush1.msra.mxu0 0.0
        %780 = vmatprep.subr.mxu0 0.0
        %781 = vmatpush1.msra.mxu0 0.0
        %782 = vmatprep.subr.mxu0 0.0
        %783 = vmatpush1.msra.mxu0 0.0
        %784 = vmatprep.subr.mxu0 0.0
        %785 = vmatpush1.msra.mxu0 0.0
        %786 = vmatprep.subr.mxu0 0.0
        %787 = vmatpush1.msra.mxu0 0.0
        %788 = vmatprep.subr.mxu0 0.0
        %789 = vmatpush1.msra.mxu0 0.0
        %790 = vmatprep.subr.mxu0 0.0
        %791 = vmatpush1.msra.mxu0 0.0
        %792 = vmatprep.subr.mxu0 0.0
        %793 = vmatpush1.msra.mxu0 0.0
        %794 = vmatprep.subr.mxu0 0.0
        %795 = vmatpush1.msra.mxu0 0.0
        %796 = vmatprep.subr.mxu0 0.0
        %797 = vmatpush1.msra.mxu0 0.0
        %798 = vmatprep.subr.mxu0 0.0
        %799 = vmatpush1.msra.mxu0 0.0
        %800 = vmatprep.subr.mxu0 0.0
        %801 = vmatpush1.msra.mxu0 0.0
        %802 = vmatprep.subr.mxu0 0.0
        %803 = vmatpush1.msra.mxu0 0.0
        %804 = vmatprep.subr.mxu0 0.0
        %805 = vmatpush1.msra.mxu0 0.0
        %806 = vmatprep.subr.mxu0 0.0
        %807 = vmatpush1.msra.mxu0 0.0
        %808 = vmatprep.subr.mxu0 0.0
        %809 = vmatpush1.msra.mxu0 0.0
        %810 = vmatprep.subr.mxu0 0.0
        %811 = vmatpush1.msra.mxu0 0.0
        %812 = vmatprep.subr.mxu0 0.0
        %813 = vmatpush1.msra.mxu0 0.0
        %814 = vmatprep.subr.mxu0 0.0
        %815 = vmatpush1.msra.mxu0 0.0
        %816 = vmatprep.subr.mxu0 0.0
        %817 = vmatpush1.msra.mxu0 0.0
        %818 = vmatprep.subr.mxu0 0.0
        %819 = vmatpush1.msra.mxu0 0.0
        %820 = vmatprep.subr.mxu0 0.0
        %821 = vmatpush1.msra.mxu0 0.0
        %822 = vmatprep.subr.mxu0 0.0
        %823 = vmatpush1.msra.mxu0 0.0
        %824 = vmatprep.subr.mxu0 0.0
        %825 = vmatpush1.msra.mxu0 0.0
        %826 = vmatprep.mubr.f32.mxu0 0.0
        %827 = vmatmul.mubr.f32.gmra.mrb[0].mxu0 %v753
        %v828 = vpop.f32.mrb[0].mxu0
        %v829 = vadd.f32 0.0, %v828
        %v830 = vpop.f32.mrb[0].mxu0
        %831 = vmatprep.mubr.f32.mxu0 0.0
        %832 = vmatmul.mubr.f32.gmra.mrb[0].mxu0 %v756
        %v833 = vpop.f32.mrb[0].mxu0
        %v834 = vadd.f32 0.0, %v833
        %v835 = vpop.f32.mrb[0].mxu0
        %836 = vdwg.mxu0
        %v838 = vsel %vm751, %v745, 0
        %v841 = vsel %vm751, %v746, 0
        %v844 = vsel %vm758, %v735, 0
        %846 = vmatprep.subr.mxu0 0.0
        %847 = vmatpush1.msra.mxu0 %v844
        %848 = vmatprep.subr.mxu0 0.0
        %849 = vmatpush1.msra.mxu0 0.0
        %850 = vmatprep.subr.mxu0 0.0
        %851 = vmatpush1.msra.mxu0 0.0
        %852 = vmatprep.subr.mxu0 0.0
        %853 = vmatpush1.msra.mxu0 0.0
        %854 = vmatprep.subr.mxu0 0.0
        %855 = vmatpush1.msra.mxu0 0.0
        %856 = vmatprep.subr.mxu0 0.0
        %857 = vmatpush1.msra.mxu0 0.0
        %858 = vmatprep.subr.mxu0 0.0
        %859 = vmatpush1.msra.mxu0 0.0
        %860 = vmatprep.subr.mxu0 0.0
        %861 = vmatpush1.msra.mxu0 0.0
        %862 = vmatprep.subr.mxu0 0.0
        %863 = vmatpush1.msra.mxu0 0.0
        %864 = vmatprep.subr.mxu0 0.0
        %865 = vmatpush1.msra.mxu0 0.0
        %866 = vmatprep.subr.mxu0 0.0
        %867 = vmatpush1.msra.mxu0 0.0
        %868 = vmatprep.subr.mxu0 0.0
        %869 = vmatpush1.msra.mxu0 0.0
        %870 = vmatprep.subr.mxu0 0.0
        %871 = vmatpush1.msra.mxu0 0.0
        %872 = vmatprep.subr.mxu0 0.0
        %873 = vmatpush1.msra.mxu0 0.0
        %874 = vmatprep.subr.mxu0 0.0
        %875 = vmatpush1.msra.mxu0 0.0
        %876 = vmatprep.subr.mxu0 0.0
        %877 = vmatpush1.msra.mxu0 0.0
        %878 = vmatprep.subr.mxu0 0.0
        %879 = vmatpush1.msra.mxu0 0.0
        %880 = vmatprep.subr.mxu0 0.0
        %881 = vmatpush1.msra.mxu0 0.0
        %882 = vmatprep.subr.mxu0 0.0
        %883 = vmatpush1.msra.mxu0 0.0
        %884 = vmatprep.subr.mxu0 0.0
        %885 = vmatpush1.msra.mxu0 0.0
        %886 = vmatprep.subr.mxu0 0.0
        %887 = vmatpush1.msra.mxu0 0.0
        %888 = vmatprep.subr.mxu0 0.0
        %889 = vmatpush1.msra.mxu0 0.0
        %890 = vmatprep.subr.mxu0 0.0
        %891 = vmatpush1.msra.mxu0 0.0
        %892 = vmatprep.subr.mxu0 0.0
        %893 = vmatpush1.msra.mxu0 0.0
        %894 = vmatprep.subr.mxu0 0.0
        %895 = vmatpush1.msra.mxu0 0.0
        %896 = vmatprep.subr.mxu0 0.0
        %897 = vmatpush1.msra.mxu0 0.0
        %898 = vmatprep.subr.mxu0 0.0
        %899 = vmatpush1.msra.mxu0 0.0
        %900 = vmatprep.subr.mxu0 0.0
        %901 = vmatpush1.msra.mxu0 0.0
        %902 = vmatprep.subr.mxu0 0.0
        %903 = vmatpush1.msra.mxu0 0.0
        %904 = vmatprep.subr.mxu0 0.0
        %905 = vmatpush1.msra.mxu0 0.0
        %906 = vmatprep.subr.mxu0 0.0
        %907 = vmatpush1.msra.mxu0 0.0
        %908 = vmatprep.subr.mxu0 0.0
        %909 = vmatpush1.msra.mxu0 0.0
        %910 = vmatprep.mubr.f32.mxu0 0.0
        %911 = vmatmul.mubr.f32.gmra.mrb[0].mxu0 %v838
        %v912 = vpop.f32.mrb[0].mxu0
        %v913 = vadd.f32 0.0, %v912
        %v914 = vpop.f32.mrb[0].mxu0
        %915 = vmatprep.mubr.f32.mxu0 0.0
        %916 = vmatmul.mubr.f32.gmra.mrb[0].mxu0 %v841
        %v917 = vpop.f32.mrb[0].mxu0
        %v918 = vadd.f32 0.0, %v917
        %v919 = vpop.f32.mrb[0].mxu0
        %920 = vdwg.mxu0
        %v922 = vsel %vm751, %v747, 0
        %v925 = vsel %vm751, %v748, 0
        %v928 = vsel %vm758, %v736, 0
        %930 = vmatprep.subr.mxu0 0.0
        %931 = vmatpush1.msra.mxu0 %v928
        %932 = vmatprep.subr.mxu0 0.0
        %933 = vmatpush1.msra.mxu0 0.0
        %934 = vmatprep.subr.mxu0 0.0
        %935 = vmatpush1.msra.mxu0 0.0
        %936 = vmatprep.subr.mxu0 0.0
        %937 = vmatpush1.msra.mxu0 0.0
        %938 = vmatprep.subr.mxu0 0.0
        %939 = vmatpush1.msra.mxu0 0.0
        %940 = vmatprep.subr.mxu0 0.0
        %941 = vmatpush1.msra.mxu0 0.0
        %942 = vmatprep.subr.mxu0 0.0
        %943 = vmatpush1.msra.mxu0 0.0
        %944 = vmatprep.subr.mxu0 0.0
        %945 = vmatpush1.msra.mxu0 0.0
        %946 = vmatprep.subr.mxu0 0.0
        %947 = vmatpush1.msra.mxu0 0.0
        %948 = vmatprep.subr.mxu0 0.0
        %949 = vmatpush1.msra.mxu0 0.0
        %950 = vmatprep.subr.mxu0 0.0
        %951 = vmatpush1.msra.mxu0 0.0
        %952 = vmatprep.subr.mxu0 0.0
        %953 = vmatpush1.msra.mxu0 0.0
        %954 = vmatprep.subr.mxu0 0.0
        %955 = vmatpush1.msra.mxu0 0.0
        %956 = vmatprep.subr.mxu0 0.0
        %957 = vmatpush1.msra.mxu0 0.0
        %958 = vmatprep.subr.mxu0 0.0
        %959 = vmatpush1.msra.mxu0 0.0
        %960 = vmatprep.subr.mxu0 0.0
        %961 = vmatpush1.msra.mxu0 0.0
        %962 = vmatprep.subr.mxu0 0.0
        %963 = vmatpush1.msra.mxu0 0.0
        %964 = vmatprep.subr.mxu0 0.0
        %965 = vmatpush1.msra.mxu0 0.0
        %966 = vmatprep.subr.mxu0 0.0
        %967 = vmatpush1.msra.mxu0 0.0
        %968 = vmatprep.subr.mxu0 0.0
        %969 = vmatpush1.msra.mxu0 0.0
        %970 = vmatprep.subr.mxu0 0.0
        %971 = vmatpush1.msra.mxu0 0.0
        %972 = vmatprep.subr.mxu0 0.0
        %973 = vmatpush1.msra.mxu0 0.0
        %974 = vmatprep.subr.mxu0 0.0
        %975 = vmatpush1.msra.mxu0 0.0
        %976 = vmatprep.subr.mxu0 0.0
        %977 = vmatpush1.msra.mxu0 0.0
        %978 = vmatprep.subr.mxu0 0.0
        %979 = vmatpush1.msra.mxu0 0.0
        %980 = vmatprep.subr.mxu0 0.0
        %981 = vmatpush1.msra.mxu0 0.0
        %982 = vmatprep.subr.mxu0 0.0
        %983 = vmatpush1.msra.mxu0 0.0
        %984 = vmatprep.subr.mxu0 0.0
        %985 = vmatpush1.msra.mxu0 0.0
        %986 = vmatprep.subr.mxu0 0.0
        %987 = vmatpush1.msra.mxu0 0.0
        %988 = vmatprep.subr.mxu0 0.0
        %989 = vmatpush1.msra.mxu0 0.0
        %990 = vmatprep.subr.mxu0 0.0
        %991 = vmatpush1.msra.mxu0 0.0
        %992 = vmatprep.subr.mxu0 0.0
        %993 = vmatpush1.msra.mxu0 0.0
        %994 = vmatprep.mubr.f32.mxu0 0.0
        %995 = vmatmul.mubr.f32.gmra.mrb[0].mxu0 %v922
        %v996 = vpop.f32.mrb[0].mxu0
        %v997 = vadd.f32 0.0, %v996
        %v998 = vpop.f32.mrb[0].mxu0
        %999 = vmatprep.mubr.f32.mxu0 0.0
        %1000 = vmatmul.mubr.f32.gmra.mrb[0].mxu0 %v925
        %v1001 = vpop.f32.mrb[0].mxu0
        %v1002 = vadd.f32 0.0, %v1001
        %v1003 = vpop.f32.mrb[0].mxu0
        %1004 = vdwg.mxu0
        %v1006 = vsel %vm751, %v749, 0
        %v1009 = vsel %vm751, %v750, 0
        %v1012 = vsel %vm758, %v737, 0
        %1014 = vmatprep.subr.mxu0 0.0
        %1015 = vmatpush1.msra.mxu0 %v1012
        %1016 = vmatprep.subr.mxu0 0.0
        %1017 = vmatpush1.msra.mxu0 0.0
        %1018 = vmatprep.subr.mxu0 0.0
        %1019 = vmatpush1.msra.mxu0 0.0
        %1020 = vmatprep.subr.mxu0 0.0
        %1021 = vmatpush1.msra.mxu0 0.0
        %1022 = vmatprep.subr.mxu0 0.0
        %1023 = vmatpush1.msra.mxu0 0.0
        %1024 = vmatprep.subr.mxu0 0.0
        %1025 = vmatpush1.msra.mxu0 0.0
        %1026 = vmatprep.subr.mxu0 0.0
        %1027 = vmatpush1.msra.mxu0 0.0
        %1028 = vmatprep.subr.mxu0 0.0
        %1029 = vmatpush1.msra.mxu0 0.0
        %1030 = vmatprep.subr.mxu0 0.0
        %1031 = vmatpush1.msra.mxu0 0.0
        %1032 = vmatprep.subr.mxu0 0.0
        %1033 = vmatpush1.msra.mxu0 0.0
        %1034 = vmatprep.subr.mxu0 0.0
        %1035 = vmatpush1.msra.mxu0 0.0
        %1036 = vmatprep.subr.mxu0 0.0
        %1037 = vmatpush1.msra.mxu0 0.0
        %1038 = vmatprep.subr.mxu0 0.0
        %1039 = vmatpush1.msra.mxu0 0.0
        %1040 = vmatprep.subr.mxu0 0.0
        %1041 = vmatpush1.msra.mxu0 0.0
        %1042 = vmatprep.subr.mxu0 0.0
        %1043 = vmatpush1.msra.mxu0 0.0
        %1044 = vmatprep.subr.mxu0 0.0
        %1045 = vmatpush1.msra.mxu0 0.0
        %1046 = vmatprep.subr.mxu0 0.0
        %1047 = vmatpush1.msra.mxu0 0.0
        %1048 = vmatprep.subr.mxu0 0.0
        %1049 = vmatpush1.msra.mxu0 0.0
        %1050 = vmatprep.subr.mxu0 0.0
        %1051 = vmatpush1.msra.mxu0 0.0
        %1052 = vmatprep.subr.mxu0 0.0
        %1053 = vmatpush1.msra.mxu0 0.0
        %1054 = vmatprep.subr.mxu0 0.0
        %1055 = vmatpush1.msra.mxu0 0.0
        %1056 = vmatprep.subr.mxu0 0.0
        %1057 = vmatpush1.msra.mxu0 0.0
        %1058 = vmatprep.subr.mxu0 0.0
        %1059 = vmatpush1.msra.mxu0 0.0
        %1060 = vmatprep.subr.mxu0 0.0
        %1061 = vmatpush1.msra.mxu0 0.0
        %1062 = vmatprep.subr.mxu0 0.0
        %1063 = vmatpush1.msra.mxu0 0.0
        %1064 = vmatprep.subr.mxu0 0.0
        %1065 = vmatpush1.msra.mxu0 0.0
        %1066 = vmatprep.subr.mxu0 0.0
        %1067 = vmatpush1.msra.mxu0 0.0
        %1068 = vmatprep.subr.mxu0 0.0
        %1069 = vmatpush1.msra.mxu0 0.0
        %1070 = vmatprep.subr.mxu0 0.0
        %1071 = vmatpush1.msra.mxu0 0.0
        %1072 = vmatprep.subr.mxu0 0.0
        %1073 = vmatpush1.msra.mxu0 0.0
        %1074 = vmatprep.subr.mxu0 0.0
        %1075 = vmatpush1.msra.mxu0 0.0
        %1076 = vmatprep.subr.mxu0 0.0
        %1077 = vmatpush1.msra.mxu0 0.0
        %1078 = vmatprep.mubr.f32.mxu0 0.0
        %1079 = vmatmul.mubr.f32.gmra.mrb[0].mxu0 %v1006
        %v1080 = vpop.f32.mrb[0].mxu0
        %v1081 = vadd.f32 0.0, %v1080
        %v1082 = vpop.f32.mrb[0].mxu0
        %1083 = vmatprep.mubr.f32.mxu0 0.0
        %1084 = vmatmul.mubr.f32.gmra.mrb[0].mxu0 %v1009
        %v1085 = vpop.f32.mrb[0].mxu0
        %v1086 = vadd.f32 0.0, %v1085
        %v1087 = vpop.f32.mrb[0].mxu0
        %1088 = vdwg.mxu0
        %v1089 = vld [vmem:[%s4] sm:$0x3]
        %vm1090 = vcmask 15360
        %v1092 = vsel %vm1090, %v829, 0
        %v1095 = vsel %vm1090, %v834, 0
        %v1098 = vsel %vm1090, %v913, 0
        %v1101 = vsel %vm1090, %v918, 0
        %v1104 = vsel %vm1090, %v997, 0
        %v1107 = vsel %vm1090, %v1002, 0
        %v1110 = vsel %vm1090, %v1081, 0
        %v1113 = vsel %vm1090, %v1086, 0
        %vm1115 = vcmask 1041408
        %v1117 = vsel %vm1115, %v1089, 0
        %1119 = vmatprep.subr.mxu0 0.0
        %1120 = vmatpush1.msra.mxu0 %v1117
        %1121 = vmatprep.subr.mxu0 0.0
        %1122 = vmatpush1.msra.mxu0 0.0
        %1123 = vmatprep.subr.mxu0 0.0
        %1124 = vmatpush1.msra.mxu0 0.0
        %1125 = vmatprep.subr.mxu0 0.0
        %1126 = vmatpush1.msra.mxu0 0.0
        %1127 = vmatprep.subr.mxu0 0.0
        %1128 = vmatpush1.msra.mxu0 0.0
        %1129 = vmatprep.subr.mxu0 0.0
        %1130 = vmatpush1.msra.mxu0 0.0
        %1131 = vmatprep.subr.mxu0 0.0
        %1132 = vmatpush1.msra.mxu0 0.0
        %1133 = vmatprep.subr.mxu0 0.0
        %1134 = vmatpush1.msra.mxu0 0.0
        %1135 = vmatprep.subr.mxu0 0.0
        %1136 = vmatpush1.msra.mxu0 0.0
        %1137 = vmatprep.subr.mxu0 0.0
        %1138 = vmatpush1.msra.mxu0 0.0
        %1139 = vmatprep.subr.mxu0 0.0
        %1140 = vmatpush1.msra.mxu0 0.0
        %1141 = vmatprep.subr.mxu0 0.0
        %1142 = vmatpush1.msra.mxu0 0.0
        %1143 = vmatprep.subr.mxu0 0.0
        %1144 = vmatpush1.msra.mxu0 0.0
        %1145 = vmatprep.subr.mxu0 0.0
        %1146 = vmatpush1.msra.mxu0 0.0
        %1147 = vmatprep.subr.mxu0 0.0
        %1148 = vmatpush1.msra.mxu0 0.0
        %1149 = vmatprep.subr.mxu0 0.0
        %1150 = vmatpush1.msra.mxu0 0.0
        %1151 = vmatprep.subr.mxu0 0.0
        %1152 = vmatpush1.msra.mxu0 0.0
        %1153 = vmatprep.subr.mxu0 0.0
        %1154 = vmatpush1.msra.mxu0 0.0
        %1155 = vmatprep.subr.mxu0 0.0
        %1156 = vmatpush1.msra.mxu0 0.0
        %1157 = vmatprep.subr.mxu0 0.0
        %1158 = vmatpush1.msra.mxu0 0.0
        %1159 = vmatprep.subr.mxu0 0.0
        %1160 = vmatpush1.msra.mxu0 0.0
        %1161 = vmatprep.subr.mxu0 0.0
        %1162 = vmatpush1.msra.mxu0 0.0
        %1163 = vmatprep.subr.mxu0 0.0
        %1164 = vmatpush1.msra.mxu0 0.0
        %1165 = vmatprep.subr.mxu0 0.0
        %1166 = vmatpush1.msra.mxu0 0.0
        %1167 = vmatprep.subr.mxu0 0.0
        %1168 = vmatpush1.msra.mxu0 0.0
        %1169 = vmatprep.subr.mxu0 0.0
        %1170 = vmatpush1.msra.mxu0 0.0
        %1171 = vmatprep.subr.mxu0 0.0
        %1172 = vmatpush1.msra.mxu0 0.0
        %1173 = vmatprep.subr.mxu0 0.0
        %1174 = vmatpush1.msra.mxu0 0.0
        %1175 = vmatprep.subr.mxu0 0.0
        %1176 = vmatpush1.msra.mxu0 0.0
        %1177 = vmatprep.subr.mxu0 0.0
        %1178 = vmatpush1.msra.mxu0 0.0
        %1179 = vmatprep.subr.mxu0 0.0
        %1180 = vmatpush1.msra.mxu0 0.0
        %1181 = vmatprep.subr.mxu0 0.0
        %1182 = vmatpush1.msra.mxu0 0.0
        %1183 = vmatprep.mubr.f32.mxu0 0.0
        %1184 = vmatmul.mubr.f32.gmra.mrb[0].mxu0 %v1092
        %v1185 = vpop.f32.mrb[0].mxu0
        %v1186 = vadd.f32 0.0, %v1185
        %v1187 = vpop.f32.mrb[0].mxu0
        %1188 = vmatprep.mubr.f32.mxu0 0.0
        %1189 = vmatmul.mubr.f32.gmra.mrb[0].mxu0 %v1095
        %v1190 = vpop.f32.mrb[0].mxu0
        %v1191 = vadd.f32 0.0, %v1190
        %v1192 = vpop.f32.mrb[0].mxu0
        %1193 = vmatprep.mubr.f32.mxu0 0.0
        %1194 = vmatmul.mubr.f32.gmra.mrb[0].mxu0 %v1098
        %v1195 = vpop.f32.mrb[0].mxu0
        %v1196 = vadd.f32 0.0, %v1195
        %v1197 = vpop.f32.mrb[0].mxu0
        %1198 = vmatprep.mubr.f32.mxu0 0.0
        %1199 = vmatmul.mubr.f32.gmra.mrb[0].mxu0 %v1101
        %v1200 = vpop.f32.mrb[0].mxu0
        %v1201 = vadd.f32 0.0, %v1200
        %v1202 = vpop.f32.mrb[0].mxu0
        %1203 = vmatprep.mubr.f32.mxu0 0.0
        %1204 = vmatmul.mubr.f32.gmra.mrb[0].mxu0 %v1104
        %v1205 = vpop.f32.mrb[0].mxu0
        %v1206 = vadd.f32 0.0, %v1205
        %v1207 = vpop.f32.mrb[0].mxu0
        %1208 = vmatprep.mubr.f32.mxu0 0.0
        %1209 = vmatmul.mubr.f32.gmra.mrb[0].mxu0 %v1107
        %v1210 = vpop.f32.mrb[0].mxu0
        %v1211 = vadd.f32 0.0, %v1210
        %v1212 = vpop.f32.mrb[0].mxu0
        %1213 = vmatprep.mubr.f32.mxu0 0.0
        %1214 = vmatmul.mubr.f32.gmra.mrb[0].mxu0 %v1110
        %v1215 = vpop.f32.mrb[0].mxu0
        %v1216 = vadd.f32 0.0, %v1215
        %v1217 = vpop.f32.mrb[0].mxu0
        %1218 = vmatprep.mubr.f32.mxu0 0.0
        %1219 = vmatmul.mubr.f32.gmra.mrb[0].mxu0 %v1113
        %v1220 = vpop.f32.mrb[0].mxu0
        %v1221 = vadd.f32 0.0, %v1220
        %v1222 = vpop.f32.mrb[0].mxu0
        %1223 = vdwg.mxu0
        %1224 = vst.msk [vmem:[%s275] sm:$0xff] %vm307, %v1186
        %1225 = vst.msk [vmem:[%s275 + $0x8] sm:$0xff] %vm307, %v1191
        %1226 = vst.msk [vmem:[%s275 + $0x10] sm:$0xff] %vm307, %v1196
        %1227 = vst.msk [vmem:[%s275 + $0x18] sm:$0xff] %vm307, %v1201
        %1228 = vst.msk [vmem:[%s275 + $0x20] sm:$0xff] %vm307, %v1206
        %1229 = vst.msk [vmem:[%s275 + $0x28] sm:$0xff] %vm307, %v1211
        %1230 = vst.msk [vmem:[%s275 + $0x30] sm:$0xff] %vm307, %v1216
        %1231 = vst.msk [vmem:[%s275 + $0x38] sm:$0xff] %vm307, %v1221
        %s1232 = sand.u32 %s161, 1
        %s1233 = scalar_lea.sflag [#allocation3], %s1232
        %s1234 = sand.u32 %s161, 1
        %s1235 = smul.addr %s1234, 64
        %s1236 = scalar_lea.vmem [#allocation2], %s1235
        %s1237 = smul.u32 4, %s22
        %p1238 = scmp.lt.s32.totalorder %s1237, 7
        %s1239 = scalar_select %p1238, %s1237, 7
        %s1240 = smul.addr %s1239, 4
        %s1241 = scalar_lea.vmem %s7, %s1240
        // Predicated region
        $region45: #{tpu_custom_call.1} parent=43 // pred_check
          %p1242 = pneg %p171
        $region46: #{tpu_custom_call.1} parent=43 // pred_check_branch
          %1244 = sbr.rel (%p1242) target = $region48
        $region47: #{tpu_custom_call.1} parent=43 // pred_region
          %s1245 = smul.u32 4, %s22
          %s1247 = ssub.s32 1024, 1024
          %1248 = vsyncadd %s1233, %s1247
          %s1249 = smul.addr %s1245, 2
          %s1250 = smul.addr %s1249, 128
          %s1251 = scalar_lea.hbm %s6, %s1250
          %s1252 = sshll.u32 %s1236, 4
          %s1253 = int_to_ptr.vmem [resolvable:$true] %s1252
          %1258 = dma.vmem_to_hbm [thread:$0]  %s1253, 1024, %s1251, %s1233, 128, 128, 8
        $region48: #{tpu_custom_call.1} parent=43 // pred_fallthru
          _
        // Predicated region
        $region49: #{tpu_custom_call.1} parent=43 // pred_check
          %p1259 = pneg %p197
        $region50: #{tpu_custom_call.1} parent=43 // pred_check_branch
          %1261 = sbr.rel (%p1259) target = $region52
        $region51: #{tpu_custom_call.1} parent=43 // pred_region
          %s1262 = smul.u32 4, %s22
        $region52: #{tpu_custom_call.1} parent=43 // pred_fallthru
          _
      $region44: #{tpu_custom_call.1} parent=5 // pred_fallthru
        _
      %p1263 = scmp.le.s32.totalorder 2, %s17
      // Predicated region
      $region53: #{tpu_custom_call.1} parent=5 // pred_check
        %p1264 = pneg %p1263
      $region54: #{tpu_custom_call.1} parent=5 // pred_check_branch
        %1266 = sbr.rel (%p1264) target = $region56
      $region55: #{tpu_custom_call.1} parent=5 // pred_region
        %s1267 = ssub.s32 %s17, 2
        // Predicated region
        $region57: #{tpu_custom_call.1} parent=55 // pred_check
          %p1268 = pneg %p177
        $region58: #{tpu_custom_call.1} parent=55 // pred_check_branch
          %1270 = sbr.rel (%p1268) target = $region60
        $region59: #{tpu_custom_call.1} parent=55 // pred_region
          %s1271 = sand.u32 %s162, 1
          %s1272 = scalar_lea.sflag [#allocation3], %s1271
          %s1273 = sand.u32 %s162, 1
          %s1274 = smul.addr %s1273, 64
          %s1275 = scalar_lea.vmem [#allocation2], %s1274
          %1276 = dma.done %s1272, 1024
        $region60: #{tpu_custom_call.1} parent=55 // pred_fallthru
          _
        // Predicated region
        $region61: #{tpu_custom_call.1} parent=55 // pred_check
          %p1277 = pneg %p203
        $region62: #{tpu_custom_call.1} parent=55 // pred_check_branch
          %1279 = sbr.rel (%p1277) target = $region64
        $region63: #{tpu_custom_call.1} parent=55 // pred_region
          %s1280 = smul.u32 4, %s23
          %p1281 = scmp.lt.s32.totalorder %s1280, 7
          %s1282 = scalar_select %p1281, %s1280, 7
          %s1283 = smul.addr %s1282, 4
          %s1284 = scalar_lea.vmem %s7, %s1283
        $region64: #{tpu_custom_call.1} parent=55 // pred_fallthru
          _
      $region56: #{tpu_custom_call.1} parent=5 // pred_fallthru
        _
    $region6: #{tpu_custom_call.1} parent=1 // loop_footer
      %s21 = sadd.s32 1, %s17
    $region7: #{tpu_custom_call.1} parent=1 // loop_footer_branch
      %16 = sbr.rel target = $region3
    $region8: #{tpu_custom_call.1} parent=1 // loop_exit
      _
    %1285 = vsyncpa [#allocation3], 1
    %s1286 = scalar_lea.sflag [#allocation3], 1
    %1287 = vsyncpa %s1286, 1

</llo_original>
